<compile_context>
chip_gen: v7x
topology: tpu7x:2x2x1
jax: 0.10.0
libtpu: 0.0.40
codegen_flags: <defaults>
</compile_context>

<pallas_src>
import functools

import jax
import jax.numpy as jnp
from jax import lax
from jax.experimental import pallas as pl
from jax.experimental.pallas import tpu as pltpu

_LANES = 128
_SUBLANES = 8
_CHUNK_ROWS = 256          # rows per in-kernel reduction chunk
_MAX_INPUT_BUDGET = 30 * 1024 * 1024   # 3 streams x 2 pipeline buffers, upper cap


def _round_up(x, m):
    return ((x + m - 1) // m) * m


def _cdiv(a, b):
    return -(-a // b)


def _vmem_capacity_bytes(default=64 * 1024 * 1024):
    """Physical VMEM of the current chip; conservative fallback if unknown."""
    try:
        info = pltpu.get_tpu_info()
        return int(getattr(info, "vmem_capacity_bytes", default))
    except Exception:
        return default


def _choose_block_rows(B, D, itemsize, max_block_rows, input_budget):
    """Batch-tile rows: VMEM-budget sized, sublane aligned, >=4 grid tiles."""
    if B <= _SUBLANES:
        return B                                   # full-dim tiny block (legal)
    rows = input_budget // (3 * 2 * D * itemsize)  # 3 streams x 2 buffers
    rows = min(rows,
               max_block_rows,
               _round_up(_cdiv(B, 4), _SUBLANES),  # >=4 tiles (megacore / pipeline)
               _round_up(B, _SUBLANES))
    rows = max(rows, _SUBLANES)
    if rows > _CHUNK_ROWS:
        rows = (rows // _CHUNK_ROWS) * _CHUNK_ROWS  # clean in-kernel chunking
    else:
        rows = (rows // _SUBLANES) * _SUBLANES
    return rows


def _triplet_loss_kernel(block_rows, chunk_rows, batch, margin,
                         a_ref, p_ref, n_ref, out_ref):
    i = pl.program_id(0)
    n_chunks = block_rows // chunk_rows            # static python int

    def body(c, acc):
        r0 = pl.multiple_of(c * chunk_rows, _SUBLANES if chunk_rows >= _SUBLANES else 1)
        # Upcast BEFORE the subtraction (precision for bf16 inputs), square and
        # reduce in f32.  Fused: one lane reduction instead of two.
        a = a_ref[pl.ds(r0, chunk_rows), :].astype(jnp.float32)
        p = p_ref[pl.ds(r0, chunk_rows), :].astype(jnp.float32)
        n = n_ref[pl.ds(r0, chunk_rows), :].astype(jnp.float32)
        dp = a - p
        dn = a - n
        contrib = jnp.sum(dp * dp - dn * dn, axis=1, keepdims=True)   # (chunk, 1)
        losses = jnp.maximum(contrib + margin, 0.0)
        # Mask overhang rows of the last (partial) block: their data is
        # undefined, and they would otherwise contribute relu(margin).
        row = (i * block_rows + r0
               + lax.broadcasted_iota(jnp.int32, (chunk_rows, 1), 0))
        losses = jnp.where(row < batch, losses, 0.0)
        return acc + jnp.sum(losses)

    tile_sum = lax.fori_loop(0, n_chunks, body, jnp.zeros((), jnp.float32),
                             unroll=True)
    # Lane-dense (unmasked) store of this tile's partial sum.
    out_ref[...] = jnp.broadcast_to(tile_sum, (1, _SUBLANES, _LANES)).astype(
        jnp.float32)


def triplet_loss(anchor, positive, negative, margin=1.0, max_block_rows=4096):
    """Pallas TPU implementation of TripletLoss.forward. Inputs: (B, D)."""
    assert anchor.shape == positive.shape == negative.shape
    assert anchor.ndim == 2
    B, D = anchor.shape
    itemsize = jnp.dtype(anchor.dtype).itemsize

    # Generation-aware VMEM sizing: budget for the 6 resident input buffers
    # plus a limit that is safe on v7x (64 MiB / TC) and lifts the v5e 16 MiB
    # scoped default.
    vmem_phys = _vmem_capacity_bytes()
    input_budget = min(vmem_phys // 2, _MAX_INPUT_BUDGET)
    vmem_limit = min((vmem_phys * 3) // 4, 64 * 1024 * 1024)

    block_rows = _choose_block_rows(B, D, itemsize, max_block_rows, input_budget)
    chunk_rows = min(block_rows, _CHUNK_ROWS)
    num_tiles = _cdiv(B, block_rows)               # last block may overhang

    # Full-D block: no feature padding needed even when D % 128 != 0.
    in_spec = pl.BlockSpec((block_rows, D), lambda i: (i, 0))
    out_spec = pl.BlockSpec((1, _SUBLANES, _LANES), lambda i: (i, 0, 0))

    kernel = functools.partial(
        _triplet_loss_kernel, block_rows, chunk_rows, B, float(margin))

    partials = pl.pallas_call(
        kernel,
        grid=(num_tiles,),
        in_specs=[in_spec, in_spec, in_spec],
        out_specs=out_spec,
        out_shape=jax.ShapeDtypeStruct((num_tiles, _SUBLANES, _LANES),
                                       jnp.float32),
        compiler_params=pltpu.CompilerParams(
            dimension_semantics=("parallel",),
            vmem_limit_bytes=vmem_limit),
        cost_estimate=pl.CostEstimate(
            flops=8 * B * D,
            transcendentals=0,
            bytes_accessed=3 * B * D * itemsize
            + num_tiles * _SUBLANES * _LANES * 4),
    )(anchor, positive, negative)

    # Finish the mean on the tiny per-tile partials in plain JAX.
    return jnp.sum(partials[:, 0, 0]) / B


def triplet_loss_ref(anchor, positive, negative, margin=1.0):
    a = anchor.astype(jnp.float32)
    p = positive.astype(jnp.float32)
    n = negative.astype(jnp.float32)
    dpos = jnp.sum((a - p) ** 2, axis=1)
    dneg = jnp.sum((a - n) ** 2, axis=1)
    return jnp.mean(jnp.maximum(dpos - dneg + margin, 0.0))


def _check(B, D, margin=1.0, dtype=jnp.float32, atol=1e-4, rtol=1e-5, seed=0):
    key = jax.random.PRNGKey(seed)
    k_a, k_p, k_n = jax.random.split(key, 3)
    anchor = jax.random.normal(k_a, (B, D), dtype=jnp.float32).astype(dtype)
    positive = jax.random.normal(k_p, (B, D), dtype=jnp.float32).astype(dtype)
    negative = jax.random.normal(k_n, (B, D), dtype=jnp.float32).astype(dtype)

    out = triplet_loss(anchor, positive, negative, margin=margin)
    out = jax.block_until_ready(out)
    ref = triplet_loss_ref(anchor, positive, negative, margin=margin)
    assert jnp.allclose(out, ref, atol=atol, rtol=rtol), (B, D, dtype, out, ref)


if __name__ == "__main__":
    # Small demo shape consistent with the module (embedding batch).
    _check(B=8, D=32, margin=1.0)
    # Multi-tile path: non-128-multiple D, overhanging (masked) last block.
    _check(B=300, D=192, margin=1.0, seed=0)
    # Half-width embeddings: kernel upcasts to f32 before subtracting.
    _check(B=300, D=192, margin=1.0, dtype=jnp.bfloat16, atol=2e-3, rtol=2e-3,
           seed=1)
    print("KERNEL_OK")
</pallas_src>

<mosaic_0001>
module attributes {stable_mosaic.version = 11 : i64} {
  func.func @_triplet_loss_kernel(%arg0: i32, %arg1: memref<8x32xf32, #tpu.memory_space<vmem>>, %arg2: memref<8x32xf32, #tpu.memory_space<vmem>>, %arg3: memref<8x32xf32, #tpu.memory_space<vmem>>, %arg4: memref<1x8x128xf32, #tpu.memory_space<vmem>>) attributes {dimension_semantics = [#tpu.dimension_semantics<parallel>], iteration_bounds = array<i64: 1>, scalar_prefetch = 0 : i64, scratch_operands = 0 : i64, tpu.core_type = #tpu.core_type<tc>, window_params = [{transform_indices = @transform_0, window_bounds = array<i64: 8, 32>}, {transform_indices = @transform_1, window_bounds = array<i64: 8, 32>}, {transform_indices = @transform_2, window_bounds = array<i64: 8, 32>}, {transform_indices = @transform_3, window_bounds = array<i64: 1, 8, 128>}]} {
    %cst = arith.constant 0.000000e+00 : f32
    %c0_i32 = arith.constant 0 : i32
    %c8_i32 = arith.constant 8 : i32
    %0 = arith.muli %c0_i32, %c8_i32 : i32
    %1 = tpu.assume_multiple %0, 8 : i32
    %2 = arith.index_cast %1 : i32 to index
    %c0 = arith.constant 0 : index
    %3 = vector.load %arg1[%2, %c0] : memref<8x32xf32, #tpu.memory_space<vmem>>, vector<8x32xf32>
    %4 = arith.index_cast %1 : i32 to index
    %c0_0 = arith.constant 0 : index
    %5 = vector.load %arg2[%4, %c0_0] : memref<8x32xf32, #tpu.memory_space<vmem>>, vector<8x32xf32>
    %6 = arith.index_cast %1 : i32 to index
    %c0_1 = arith.constant 0 : index
    %7 = vector.load %arg3[%6, %c0_1] : memref<8x32xf32, #tpu.memory_space<vmem>>, vector<8x32xf32>
    %8 = arith.subf %3, %5 : vector<8x32xf32>
    %9 = arith.subf %3, %7 : vector<8x32xf32>
    %10 = arith.mulf %8, %8 : vector<8x32xf32>
    %11 = arith.mulf %9, %9 : vector<8x32xf32>
    %12 = arith.subf %10, %11 : vector<8x32xf32>
    %cst_2 = arith.constant dense<0.000000e+00> : vector<8xf32>
    %13 = vector.multi_reduction <add>, %12, %cst_2 [1] : vector<8x32xf32> to vector<8xf32>
    %14 = vector.shape_cast %13 : vector<8xf32> to vector<8x1xf32>
    %cst_3 = arith.constant 1.000000e+00 : f32
    %15 = vector.broadcast %cst_3 : f32 to vector<8x1xf32>
    %16 = arith.addf %14, %15 : vector<8x1xf32>
    %cst_4 = arith.constant 0.000000e+00 : f32
    %17 = vector.broadcast %cst_4 : f32 to vector<8x1xf32>
    %18 = arith.maximumf %16, %17 : vector<8x1xf32>
    %c8_i32_5 = arith.constant 8 : i32
    %19 = arith.muli %arg0, %c8_i32_5 : i32
    %20 = arith.addi %19, %1 : i32
    %21 = tpu.iota {dimensions = array<i32: 0>} : vector<8x1xi32>
    %22 = vector.broadcast %20 : i32 to vector<8x1xi32>
    %23 = arith.addi %22, %21 : vector<8x1xi32>
    %c8_i32_6 = arith.constant 8 : i32
    %24 = vector.broadcast %c8_i32_6 : i32 to vector<8x1xi32>
    %25 = arith.cmpi slt, %23, %24 : vector<8x1xi32>
    %cst_7 = arith.constant 0.000000e+00 : f32
    %26 = vector.broadcast %cst_7 : f32 to vector<8x1xf32>
    %27 = arith.select %25, %18, %26 : vector<8x1xi1>, vector<8x1xf32>
    %28 = vector.shape_cast %27 : vector<8x1xf32> to vector<1x8x1xf32>
    %cst_8 = arith.constant dense<0.000000e+00> : vector<1xf32>
    %29 = vector.multi_reduction <add>, %28, %cst_8 [1, 2] : vector<1x8x1xf32> to vector<1xf32>
    %30 = vector.shape_cast %29 : vector<1xf32> to vector<1x1x1xf32>
    %31 = vector.extract %30[0, 0, 0] : f32 from vector<1x1x1xf32>
    %32 = arith.addf %cst, %31 : f32
    %c1_i32 = arith.constant 1 : i32
    %33 = vector.broadcast %32 : f32 to vector<1x8x128xf32>
    %c0_9 = arith.constant 0 : index
    %c0_10 = arith.constant 0 : index
    %c0_11 = arith.constant 0 : index
    %34 = vector.load %arg4[%c0_9, %c0_10, %c0_11] : memref<1x8x128xf32, #tpu.memory_space<vmem>>, vector<1x8x128xf32>
    tpu.vector_store %arg4[%c0_9, %c0_10, %c0_11], %33 {strides = array<i32>} : memref<1x8x128xf32, #tpu.memory_space<vmem>>, vector<1x8x128xf32>,
    return
  }
  func.func @transform_0(%arg0: i32) -> (i32, i32) {
    %c0_i32 = arith.constant 0 : i32
    %c0_i32_0 = arith.constant 0 : i32
    return %arg0, %c0_i32 : i32, i32
  }
  func.func @transform_1(%arg0: i32) -> (i32, i32) {
    %c0_i32 = arith.constant 0 : i32
    %c0_i32_0 = arith.constant 0 : i32
    return %arg0, %c0_i32 : i32, i32
  }
  func.func @transform_2(%arg0: i32) -> (i32, i32) {
    %c0_i32 = arith.constant 0 : i32
    %c0_i32_0 = arith.constant 0 : i32
    return %arg0, %c0_i32 : i32, i32
  }
  func.func @transform_3(%arg0: i32) -> (i32, i32, i32) {
    %c0_i32 = arith.constant 0 : i32
    %c0_i32_0 = arith.constant 0 : i32
    %c0_i32_1 = arith.constant 0 : i32
    return %arg0, %c0_i32, %c0_i32_0 : i32, i32, i32
  }
}

</mosaic_0001>

<llo_original>
// kernel: tpu_custom_call.1
$region0: #{tpu_custom_call.1}
  #allocation0 [shape = 'u32[]', space=smem, size = 0x4, offset = 0x4, fixed_abs, tag = 'smem constant byte address 0x4 - core index']
  #allocation1 [shape = 'u32[144,128]{1,0:T(1,128)}', space=vmem, size = 0x12000, scoped, tag = 'internal scratch']
  %s0 = inlined_call_operand.hbm [shape: f32[8,32], index: 0, kind: input, shape index: {}]
  %s1 = inlined_call_operand.hbm [shape: f32[8,32], index: 1, kind: input, shape index: {}]
  %s2 = inlined_call_operand.hbm [shape: f32[8,32], index: 2, kind: input, shape index: {}]
  %s3 = inlined_call_operand.hbm [shape: f32[1,8,128], index: 3, kind: output, shape index: {}]
  %s4 = sld [smem:[#allocation0]]
  $region34: #{tpu_custom_call.1} parent=0
    _
  %s6 = ssub.s32 1, %s4
  %s7 = scalar_select 0, %s6, %s4
  $region1: #{tpu_custom_call.1} parent=0
    #allocation2 [shape = 'u8[4096]{0}', space=vmem, size = 0x1000, scoped, tag = 'input window, operand 0, single buffered']
    #allocation3 [shape = 's32[1]{0}', space=sflag, size = 0x4, scoped, tag = 'scoped memory for tpu_custom_call.1']
    #allocation4 [shape = 's32[1]{0}', space=sflag, size = 0x4, scoped, tag = 'scoped memory for tpu_custom_call.1']
    #allocation5 [shape = 'u8[4096]{0}', space=vmem, size = 0x1000, scoped, tag = 'input window, operand 1, single buffered']
    #allocation6 [shape = 's32[1]{0}', space=sflag, size = 0x4, scoped, tag = 'scoped memory for tpu_custom_call.1']
    #allocation7 [shape = 'u8[4096]{0}', space=vmem, size = 0x1000, scoped, tag = 'input window, operand 2, single buffered']
    #allocation8 [shape = 'u8[4096]{0}', space=vmem, size = 0x1000, scoped, tag = 'output window, operand 0, single buffered']
    %8 = vsyncpa [#allocation3], 0
    %9 = vsyncpa [#allocation6], 0
    %10 = vsyncpa [#allocation4], 0
    // Predicated region
    $region2: #{tpu_custom_call.1} parent=1 // pred_check
      _
    $region3: #{tpu_custom_call.1} parent=1 // pred_check_branch
      %12 = sbr.rel (0) target = $region5
    $region4: #{tpu_custom_call.1} parent=1 // pred_region
      %s14 = ssub.s32 128, 128
      %15 = vsyncadd [#allocation3], %s14
      %s17 = sshll.u32 [#allocation2], 4
      %s18 = int_to_ptr.vmem [resolvable:$true] %s17
      %20 = dma.hbm_to_vmem [thread:$0]  %s0, 128, %s18, [#allocation3]
    $region5: #{tpu_custom_call.1} parent=1 // pred_fallthru
      _
    // Predicated region
    $region6: #{tpu_custom_call.1} parent=1 // pred_check
      _
    $region7: #{tpu_custom_call.1} parent=1 // pred_check_branch
      %22 = sbr.rel (0) target = $region9
    $region8: #{tpu_custom_call.1} parent=1 // pred_region
      %s24 = ssub.s32 128, 128
      %25 = vsyncadd [#allocation6], %s24
      %s27 = sshll.u32 [#allocation5], 4
      %s28 = int_to_ptr.vmem [resolvable:$true] %s27
      %30 = dma.hbm_to_vmem [thread:$0]  %s1, 128, %s28, [#allocation6]
    $region9: #{tpu_custom_call.1} parent=1 // pred_fallthru
      _
    // Predicated region
    $region10: #{tpu_custom_call.1} parent=1 // pred_check
      _
    $region11: #{tpu_custom_call.1} parent=1 // pred_check_branch
      %32 = sbr.rel (0) target = $region13
    $region12: #{tpu_custom_call.1} parent=1 // pred_region
      %s34 = ssub.s32 128, 128
      %35 = vsyncadd [#allocation6], %s34
      %s37 = sshll.u32 [#allocation7], 4
      %s38 = int_to_ptr.vmem [resolvable:$true] %s37
      %40 = dma.hbm_to_vmem [thread:$0]  %s2, 128, %s38, [#allocation6]
    $region13: #{tpu_custom_call.1} parent=1 // pred_fallthru
      _
    // Predicated region
    $region14: #{tpu_custom_call.1} parent=1 // pred_check
      _
    $region15: #{tpu_custom_call.1} parent=1 // pred_check_branch
      %42 = sbr.rel (0) target = $region17
    $region16: #{tpu_custom_call.1} parent=1 // pred_region
      %43 = dma.done [#allocation3], 128
    $region17: #{tpu_custom_call.1} parent=1 // pred_fallthru
      _
    // Predicated region
    $region18: #{tpu_custom_call.1} parent=1 // pred_check
      _
    $region19: #{tpu_custom_call.1} parent=1 // pred_check_branch
      %45 = sbr.rel (0) target = $region21
    $region20: #{tpu_custom_call.1} parent=1 // pred_region
      %46 = dma.done [#allocation6], 128
    $region21: #{tpu_custom_call.1} parent=1 // pred_fallthru
      _
    // Predicated region
    $region22: #{tpu_custom_call.1} parent=1 // pred_check
      _
    $region23: #{tpu_custom_call.1} parent=1 // pred_check_branch
      %48 = sbr.rel (0) target = $region25
    $region24: #{tpu_custom_call.1} parent=1 // pred_region
      %49 = dma.done [#allocation6], 128
    $region25: #{tpu_custom_call.1} parent=1 // pred_fallthru
      _
    %v50 = vld [vmem:[#allocation2] sm:$0xff]
    %v51 = vld [vmem:[#allocation5] sm:$0xff]
    %v52 = vld [vmem:[#allocation7] sm:$0xff]
    %v53 = vsub.f32 %v50, %v51
    %v54 = vsub.f32 %v50, %v52
    %v55 = vmul.f32 %v53, %v53
    %v56 = vmul.f32 %v54, %v54
    %v57 = vsub.f32 %v55, %v56
    %vm58 = vcmask 261120
    %v59 = vsel %vm58, %v57, 0.0
    %60 = vadd.xlane.f32.xlu0 %v59
    %v61 = vpop.xlane.xlu0 %60
    %v62 = vadd.f32 %v61, 1.0
    %v63 = vmax.f32 %v62, 0.0
    %s64 = smul.u32 0, 8
    %s65 = sadd.s32 %s64, 0
    %v66 = vlaneseq
    %v67 = vshrl.u32 %v66, 7
    %v68 = vstv %s65
    %v69 = vadd.s32 %v68, %v67
    %vm70 = vcmp.lt.s32.totalorder %v69, 8
    %v71 = vsel %vm70, %v63, 0.0
    %vm72 = vcmask 7168
    %v73 = vsel %vm72, %v71, 0.0
    %74 = vadd.xlane.f32.xlu0 %v73
    %v75 = vpop.xlane.xlu0 %74
    %v76 = vrot.slane %v75, 4
    %v77 = vadd.f32 %v75, %v76
    %v78 = vrot.slane %v77, 2
    %v79 = vadd.f32 %v77, %v78
    %v80 = vrot.slane %v79, 1
    %v81 = vadd.f32 %v79, %v80
    %s82 = vtos %v81
    %s83 = sadd.f32 %s82, 0.0
    %v84 = vstv %s83
    %85 = vst [vmem:[#allocation8] sm:$0xff] %v84
    // Predicated region
    $region26: #{tpu_custom_call.1} parent=1 // pred_check
      _
    $region27: #{tpu_custom_call.1} parent=1 // pred_check_branch
      %87 = sbr.rel (0) target = $region29
    $region28: #{tpu_custom_call.1} parent=1 // pred_region
      %s89 = ssub.s32 128, 128
      %90 = vsyncadd [#allocation4], %s89
      %s92 = sshll.u32 [#allocation8], 4
      %s93 = int_to_ptr.vmem [resolvable:$true] %s92
      %95 = dma.vmem_to_hbm [thread:$0]  %s93, 128, %s3, [#allocation4]
    $region29: #{tpu_custom_call.1} parent=1 // pred_fallthru
      _
    // Predicated region
    $region30: #{tpu_custom_call.1} parent=1 // pred_check
      _
    $region31: #{tpu_custom_call.1} parent=1 // pred_check_branch
      %97 = sbr.rel (0) target = $region33
    $region32: #{tpu_custom_call.1} parent=1 // pred_region
      %98 = dma.done [#allocation4], 128
    $region33: #{tpu_custom_call.1} parent=1 // pred_fallthru
      _
    %99 = vsyncpa [#allocation3], 1
    %100 = vsyncpa [#allocation6], 1
    %101 = vsyncpa [#allocation4], 1

</llo_original>
